<compile_context>
chip_gen: v7x
topology: tpu7x:2x2x1
jax: 0.10.0
libtpu: 0.0.40
codegen_flags: <defaults>
</compile_context>

<pallas_src>
import functools

import jax
import jax.numpy as jnp
from jax.experimental import pallas as pl
from jax.experimental.pallas import tpu as pltpu


# ---------------------------------------------------------------------------
# Fused kernel: Chebyshev diffusion, shared across the batch (batch on lanes)
# ---------------------------------------------------------------------------
def _graphconv_kernel(x_ref, a_ref, o_ref, x0_s, x1_s, *, max_step, n_supports):
    # x_ref : (N, B*D)      input, batch folded onto lanes (col = b*D + d)
    # a_ref : (S, N, N)     dense diffusion supports
    # o_ref : (M, N, B*D)   diffusion feature slabs, M = S*max_step + 1
    # x0_s / x1_s : (N, B*D) f32 scratch holding the Chebyshev recursion state
    x_in = x_ref[...].astype(jnp.float32)
    o_ref[0] = x_in.astype(o_ref.dtype)                    # metric 0: identity

    if max_step > 0:                                       # static Python branch
        x0_s[...] = x_in
        for s in range(n_supports):                        # small static unroll
            a = a_ref[s].astype(jnp.float32)               # (N, N)
            # NOTE: x0/x1 deliberately carry over from one support to the next,
            # mirroring the reference PyTorch loop.
            x1 = jnp.dot(a, x0_s[...], preferred_element_type=jnp.float32)
            x1_s[...] = x1
            base = 1 + s * max_step
            o_ref[base] = x1.astype(o_ref.dtype)

            @pl.loop(2, max_step + 1, unroll=True)
            def _(k):
                x2 = (2.0 * jnp.dot(a, x1_s[...],
                                    preferred_element_type=jnp.float32)
                      - x0_s[...])
                o_ref[base + k - 1] = x2.astype(o_ref.dtype)
                x0_s[...] = x1_s[...]
                x1_s[...] = x2


def graph_conv(x, supports, w, b, max_step):
    """GraphConv forward.

    x:        [B, N, D]
    supports: list of dense [N, N] supports
    w:        [D*M, Dout] with PyTorch row order (row index = d*M + m),
              M = len(supports)*max_step + 1
    b:        [Dout]
    returns   [B, N, Dout]
    """
    B, N, D = x.shape
    S = len(supports)
    M = S * max_step + 1
    Dout = w.shape[1]
    assert w.shape[0] == D * M

    # Fold batch onto lanes: one shared A @ X matmul per diffusion step serves
    # the whole batch.  (For lane-dense MXU use, pick B*D as a multiple of 128
    # in real configs; the demo shapes are tiny.)
    x_wide = jnp.transpose(x, (1, 0, 2)).reshape(N, B * D)      # (N, B*D)
    a_stack = jnp.stack(supports, axis=0)                       # (S, N, N)
    # TODO(synk): cast a_stack / x_wide to bf16 here for large N (kept f32 so
    # the demo matches the f32 reference to 1e-4).

    itemsize = jnp.dtype(x.dtype).itemsize
    resident_bytes = (
        N * B * D * itemsize          # x_wide
        + S * N * N * itemsize        # supports (single-buffered)
        + M * N * B * D * itemsize    # output feature slabs
        + 2 * N * B * D * 4           # x0/x1 f32 scratch
    )
    vmem_limit = int(min(max(2 * resident_bytes, 4 << 20), 64 << 20))

    flops = 2 * S * max_step * N * N * B * D + 4 * S * max_step * N * B * D
    bytes_accessed = (N * B * D + S * N * N + M * N * B * D) * itemsize

    kernel = functools.partial(_graphconv_kernel,
                               max_step=max_step, n_supports=S)
    feats = pl.pallas_call(
        kernel,
        out_shape=jax.ShapeDtypeStruct((M, N, B * D), x.dtype),
        scratch_shapes=[pltpu.VMEM((N, B * D), jnp.float32),
                        pltpu.VMEM((N, B * D), jnp.float32)],
        compiler_params=pltpu.CompilerParams(vmem_limit_bytes=vmem_limit),
        cost_estimate=pl.CostEstimate(flops=flops, transcendentals=0,
                                      bytes_accessed=bytes_accessed),
    )(x_wide, a_stack)

    # Output Linear (XLA): regroup features to PyTorch's (d-major, m-minor)
    # column order and contract once over D*M.  No block-diagonal weight, no
    # wasted MXU FLOPs on zero blocks.
    xcat = feats.reshape(M, N, B, D).transpose(2, 1, 3, 0).reshape(B, N, D * M)
    return xcat @ w + b


# ---------------------------------------------------------------------------
# Pure-JAX reference: literal transcription of the PyTorch forward
# ---------------------------------------------------------------------------
def _graph_conv_ref(x, supports, w, b, max_step):
    B, N, D = x.shape
    x0 = jnp.transpose(x, (1, 2, 0)).reshape(N, D * B)   # (n, d*b), PyTorch x0
    feats = [x0]
    if max_step != 0:
        for a in supports:
            x1 = a @ x0
            feats.append(x1)
            for _ in range(2, max_step + 1):
                x2 = 2.0 * (a @ x1) - x0
                feats.append(x2)
                x1, x0 = x2, x1
    M = len(feats)
    xcat = jnp.stack(feats, axis=0)                       # (M, n, d*b)
    xcat = xcat.reshape(M, N, D, B).transpose(3, 1, 2, 0).reshape(B, N, D * M)
    return xcat @ w + b


if __name__ == "__main__":
    B, N = 2, 16
    input_dim, output_dim = 4, 8
    n_supports, max_step = 2, 2
    M = n_supports * max_step + 1

    key = jax.random.PRNGKey(0)
    kx, ks, kw, kb = jax.random.split(key, 4)

    x = jax.random.normal(kx, (B, N, input_dim), jnp.float32)
    sup_raw = jax.random.uniform(ks, (n_supports, N, N), jnp.float32) + 0.1
    supports = [s / jnp.sum(s, axis=1, keepdims=True) for s in sup_raw]

    w = jax.random.normal(kw, (input_dim * M, output_dim), jnp.float32) * 0.1
    b = jax.random.normal(kb, (output_dim,), jnp.float32) * 0.1

    out = graph_conv(x, supports, w, b, max_step)
    out = jax.block_until_ready(out)

    ref = _graph_conv_ref(x, supports, w, b, max_step)
    assert out.shape == (B, N, output_dim)
    assert jnp.allclose(out, ref, atol=1e-4, rtol=1e-4), "mismatch vs reference"

    print("KERNEL_OK")
</pallas_src>

<mosaic_0001>
module attributes {stable_mosaic.version = 11 : i64} {
  func.func @_graphconv_kernel(%arg0: memref<16x8xf32, #tpu.memory_space<vmem>>, %arg1: memref<2x16x16xf32, #tpu.memory_space<vmem>>, %arg2: memref<5x16x8xf32, #tpu.memory_space<vmem>>, %arg3: memref<16x8xf32, #tpu.memory_space<vmem>>, %arg4: memref<16x8xf32, #tpu.memory_space<vmem>>) attributes {dimension_semantics = [], scalar_prefetch = 0 : i64, scratch_operands = 2 : i64, tpu.core_type = #tpu.core_type<tc>} {
    %c0 = arith.constant 0 : index
    %c0_0 = arith.constant 0 : index
    %0 = vector.load %arg0[%c0, %c0_0] : memref<16x8xf32, #tpu.memory_space<vmem>>, vector<16x8xf32>
    %c0_1 = arith.constant 0 : index
    %c0_2 = arith.constant 0 : index
    %c0_3 = arith.constant 0 : index
    %1 = vector.load %arg2[%c0_1, %c0_2, %c0_3] : memref<5x16x8xf32, #tpu.memory_space<vmem>>, vector<1x16x8xf32>
    %2 = vector.shape_cast %1 : vector<1x16x8xf32> to vector<16x8xf32>
    %3 = vector.shape_cast %0 : vector<16x8xf32> to vector<1x16x8xf32>
    tpu.vector_store %arg2[%c0_1, %c0_2, %c0_3], %3 {strides = array<i32>} : memref<5x16x8xf32, #tpu.memory_space<vmem>>, vector<1x16x8xf32>,
    %c0_4 = arith.constant 0 : index
    %c0_5 = arith.constant 0 : index
    %4 = vector.load %arg3[%c0_4, %c0_5] : memref<16x8xf32, #tpu.memory_space<vmem>>, vector<16x8xf32>
    tpu.vector_store %arg3[%c0_4, %c0_5], %0 {strides = array<i32>} : memref<16x8xf32, #tpu.memory_space<vmem>>, vector<16x8xf32>,
    %c0_6 = arith.constant 0 : index
    %c0_7 = arith.constant 0 : index
    %c0_8 = arith.constant 0 : index
    %5 = vector.load %arg1[%c0_6, %c0_7, %c0_8] : memref<2x16x16xf32, #tpu.memory_space<vmem>>, vector<1x16x16xf32>
    %6 = vector.shape_cast %5 : vector<1x16x16xf32> to vector<16x16xf32>
    %c0_9 = arith.constant 0 : index
    %c0_10 = arith.constant 0 : index
    %7 = vector.load %arg3[%c0_9, %c0_10] : memref<16x8xf32, #tpu.memory_space<vmem>>, vector<16x8xf32>
    %cst = arith.constant dense<0.000000e+00> : vector<16x8xf32>
    %8 = tpu.matmul %6, %7, %cst {dimension_numbers = #tpu.dot_dimension_numbers<[1], [0], [0], [1], [0, 0, 1, 1], [], []>} : vector<16x16xf32>, vector<16x8xf32>, vector<16x8xf32> -> vector<16x8xf32>
    %c0_11 = arith.constant 0 : index
    %c0_12 = arith.constant 0 : index
    %9 = vector.load %arg4[%c0_11, %c0_12] : memref<16x8xf32, #tpu.memory_space<vmem>>, vector<16x8xf32>
    tpu.vector_store %arg4[%c0_11, %c0_12], %8 {strides = array<i32>} : memref<16x8xf32, #tpu.memory_space<vmem>>, vector<16x8xf32>,
    %c1 = arith.constant 1 : index
    %c0_13 = arith.constant 0 : index
    %c0_14 = arith.constant 0 : index
    %10 = vector.load %arg2[%c1, %c0_13, %c0_14] : memref<5x16x8xf32, #tpu.memory_space<vmem>>, vector<1x16x8xf32>
    %11 = vector.shape_cast %10 : vector<1x16x8xf32> to vector<16x8xf32>
    %12 = vector.shape_cast %8 : vector<16x8xf32> to vector<1x16x8xf32>
    tpu.vector_store %arg2[%c1, %c0_13, %c0_14], %12 {strides = array<i32>} : memref<5x16x8xf32, #tpu.memory_space<vmem>>, vector<1x16x8xf32>,
    %c0_i32 = arith.constant 0 : i32
    %c1_i32 = arith.constant 1 : i32
    %13 = arith.muli %c0_i32, %c1_i32 : i32
    %c2_i32 = arith.constant 2 : i32
    %14 = arith.addi %c2_i32, %13 : i32
    %c0_15 = arith.constant 0 : index
    %c0_16 = arith.constant 0 : index
    %15 = vector.load %arg4[%c0_15, %c0_16] : memref<16x8xf32, #tpu.memory_space<vmem>>, vector<16x8xf32>
    %cst_17 = arith.constant dense<0.000000e+00> : vector<16x8xf32>
    %16 = tpu.matmul %6, %15, %cst_17 {dimension_numbers = #tpu.dot_dimension_numbers<[1], [0], [0], [1], [0, 0, 1, 1], [], []>} : vector<16x16xf32>, vector<16x8xf32>, vector<16x8xf32> -> vector<16x8xf32>
    %cst_18 = arith.constant 2.000000e+00 : f32
    %17 = vector.broadcast %cst_18 : f32 to vector<16x8xf32>
    %18 = arith.mulf %17, %16 : vector<16x8xf32>
    %c0_19 = arith.constant 0 : index
    %c0_20 = arith.constant 0 : index
    %19 = vector.load %arg3[%c0_19, %c0_20] : memref<16x8xf32, #tpu.memory_space<vmem>>, vector<16x8xf32>
    %20 = arith.subf %18, %19 : vector<16x8xf32>
    %c1_i32_21 = arith.constant 1 : i32
    %21 = arith.addi %c1_i32_21, %14 : i32
    %c1_i32_22 = arith.constant 1 : i32
    %22 = arith.subi %21, %c1_i32_22 : i32
    %23 = arith.index_cast %22 : i32 to index
    %c0_23 = arith.constant 0 : index
    %c0_24 = arith.constant 0 : index
    %24 = vector.load %arg2[%23, %c0_23, %c0_24] : memref<5x16x8xf32, #tpu.memory_space<vmem>>, vector<1x16x8xf32>
    %25 = vector.shape_cast %24 : vector<1x16x8xf32> to vector<16x8xf32>
    %26 = vector.shape_cast %20 : vector<16x8xf32> to vector<1x16x8xf32>
    tpu.vector_store %arg2[%23, %c0_23, %c0_24], %26 {strides = array<i32>} : memref<5x16x8xf32, #tpu.memory_space<vmem>>, vector<1x16x8xf32>,
    %c0_25 = arith.constant 0 : index
    %c0_26 = arith.constant 0 : index
    %27 = vector.load %arg4[%c0_25, %c0_26] : memref<16x8xf32, #tpu.memory_space<vmem>>, vector<16x8xf32>
    %c0_27 = arith.constant 0 : index
    %c0_28 = arith.constant 0 : index
    %28 = vector.load %arg3[%c0_27, %c0_28] : memref<16x8xf32, #tpu.memory_space<vmem>>, vector<16x8xf32>
    tpu.vector_store %arg3[%c0_27, %c0_28], %27 {strides = array<i32>} : memref<16x8xf32, #tpu.memory_space<vmem>>, vector<16x8xf32>,
    %c0_29 = arith.constant 0 : index
    %c0_30 = arith.constant 0 : index
    %29 = vector.load %arg4[%c0_29, %c0_30] : memref<16x8xf32, #tpu.memory_space<vmem>>, vector<16x8xf32>
    tpu.vector_store %arg4[%c0_29, %c0_30], %20 {strides = array<i32>} : memref<16x8xf32, #tpu.memory_space<vmem>>, vector<16x8xf32>,
    %c1_i32_31 = arith.constant 1 : i32
    %c1_32 = arith.constant 1 : index
    %c0_33 = arith.constant 0 : index
    %c0_34 = arith.constant 0 : index
    %30 = vector.load %arg1[%c1_32, %c0_33, %c0_34] : memref<2x16x16xf32, #tpu.memory_space<vmem>>, vector<1x16x16xf32>
    %31 = vector.shape_cast %30 : vector<1x16x16xf32> to vector<16x16xf32>
    %c0_35 = arith.constant 0 : index
    %c0_36 = arith.constant 0 : index
    %32 = vector.load %arg3[%c0_35, %c0_36] : memref<16x8xf32, #tpu.memory_space<vmem>>, vector<16x8xf32>
    %cst_37 = arith.constant dense<0.000000e+00> : vector<16x8xf32>
    %33 = tpu.matmul %31, %32, %cst_37 {dimension_numbers = #tpu.dot_dimension_numbers<[1], [0], [0], [1], [0, 0, 1, 1], [], []>} : vector<16x16xf32>, vector<16x8xf32>, vector<16x8xf32> -> vector<16x8xf32>
    %c0_38 = arith.constant 0 : index
    %c0_39 = arith.constant 0 : index
    %34 = vector.load %arg4[%c0_38, %c0_39] : memref<16x8xf32, #tpu.memory_space<vmem>>, vector<16x8xf32>
    tpu.vector_store %arg4[%c0_38, %c0_39], %33 {strides = array<i32>} : memref<16x8xf32, #tpu.memory_space<vmem>>, vector<16x8xf32>,
    %c3 = arith.constant 3 : index
    %c0_40 = arith.constant 0 : index
    %c0_41 = arith.constant 0 : index
    %35 = vector.load %arg2[%c3, %c0_40, %c0_41] : memref<5x16x8xf32, #tpu.memory_space<vmem>>, vector<1x16x8xf32>
    %36 = vector.shape_cast %35 : vector<1x16x8xf32> to vector<16x8xf32>
    %37 = vector.shape_cast %33 : vector<16x8xf32> to vector<1x16x8xf32>
    tpu.vector_store %arg2[%c3, %c0_40, %c0_41], %37 {strides = array<i32>} : memref<5x16x8xf32, #tpu.memory_space<vmem>>, vector<1x16x8xf32>,
    %c0_i32_42 = arith.constant 0 : i32
    %c1_i32_43 = arith.constant 1 : i32
    %38 = arith.muli %c0_i32_42, %c1_i32_43 : i32
    %c2_i32_44 = arith.constant 2 : i32
    %39 = arith.addi %c2_i32_44, %38 : i32
    %c0_45 = arith.constant 0 : index
    %c0_46 = arith.constant 0 : index
    %40 = vector.load %arg4[%c0_45, %c0_46] : memref<16x8xf32, #tpu.memory_space<vmem>>, vector<16x8xf32>
    %cst_47 = arith.constant dense<0.000000e+00> : vector<16x8xf32>
    %41 = tpu.matmul %31, %40, %cst_47 {dimension_numbers = #tpu.dot_dimension_numbers<[1], [0], [0], [1], [0, 0, 1, 1], [], []>} : vector<16x16xf32>, vector<16x8xf32>, vector<16x8xf32> -> vector<16x8xf32>
    %cst_48 = arith.constant 2.000000e+00 : f32
    %42 = vector.broadcast %cst_48 : f32 to vector<16x8xf32>
    %43 = arith.mulf %42, %41 : vector<16x8xf32>
    %c0_49 = arith.constant 0 : index
    %c0_50 = arith.constant 0 : index
    %44 = vector.load %arg3[%c0_49, %c0_50] : memref<16x8xf32, #tpu.memory_space<vmem>>, vector<16x8xf32>
    %45 = arith.subf %43, %44 : vector<16x8xf32>
    %c3_i32 = arith.constant 3 : i32
    %46 = arith.addi %c3_i32, %39 : i32
    %c1_i32_51 = arith.constant 1 : i32
    %47 = arith.subi %46, %c1_i32_51 : i32
    %48 = arith.index_cast %47 : i32 to index
    %c0_52 = arith.constant 0 : index
    %c0_53 = arith.constant 0 : index
    %49 = vector.load %arg2[%48, %c0_52, %c0_53] : memref<5x16x8xf32, #tpu.memory_space<vmem>>, vector<1x16x8xf32>
    %50 = vector.shape_cast %49 : vector<1x16x8xf32> to vector<16x8xf32>
    %51 = vector.shape_cast %45 : vector<16x8xf32> to vector<1x16x8xf32>
    tpu.vector_store %arg2[%48, %c0_52, %c0_53], %51 {strides = array<i32>} : memref<5x16x8xf32, #tpu.memory_space<vmem>>, vector<1x16x8xf32>,
    %c0_54 = arith.constant 0 : index
    %c0_55 = arith.constant 0 : index
    %52 = vector.load %arg4[%c0_54, %c0_55] : memref<16x8xf32, #tpu.memory_space<vmem>>, vector<16x8xf32>
    %c0_56 = arith.constant 0 : index
    %c0_57 = arith.constant 0 : index
    %53 = vector.load %arg3[%c0_56, %c0_57] : memref<16x8xf32, #tpu.memory_space<vmem>>, vector<16x8xf32>
    tpu.vector_store %arg3[%c0_56, %c0_57], %52 {strides = array<i32>} : memref<16x8xf32, #tpu.memory_space<vmem>>, vector<16x8xf32>,
    %c0_58 = arith.constant 0 : index
    %c0_59 = arith.constant 0 : index
    %54 = vector.load %arg4[%c0_58, %c0_59] : memref<16x8xf32, #tpu.memory_space<vmem>>, vector<16x8xf32>
    tpu.vector_store %arg4[%c0_58, %c0_59], %45 {strides = array<i32>} : memref<16x8xf32, #tpu.memory_space<vmem>>, vector<16x8xf32>,
    %c1_i32_60 = arith.constant 1 : i32
    return
  }
}

</mosaic_0001>

<llo_original>
// kernel: tpu_custom_call.1
$region0: #{tpu_custom_call.1}
  #allocation0 [shape = 'u32[]', space=smem, size = 0x4, offset = 0x4, fixed_abs, tag = 'smem constant byte address 0x4 - core index']
  #allocation1 [shape = 'u32[144,128]{1,0:T(1,128)}', space=vmem, size = 0x12000, scoped, tag = 'internal scratch']
  #allocation2 [shape = 'f32[16,8]{1,0:T(8,128)}', space=vmem, size = 0x2000, scoped, tag = 'scratch operand']
  #allocation3 [shape = 'f32[16,8]{1,0:T(8,128)}', space=vmem, size = 0x2000, scoped, tag = 'scratch operand']
  %s0 = inlined_call_operand.vmem [shape: f32[16,8], index: 0, kind: input, shape index: {}]
  %s1 = inlined_call_operand.hbm [shape: f32[2,16,16], index: 1, kind: input, shape index: {}]
  %s2 = inlined_call_operand.vmem [shape: f32[5,16,8], index: 2, kind: output, shape index: {}]
  %s3 = sld [smem:[#allocation0]]
  $region22: #{tpu_custom_call.1} parent=0
    _
  %s5 = ssub.s32 1, %s3
  %s6 = scalar_select 0, %s5, %s3
  $region1: #{tpu_custom_call.1} parent=0
    #allocation4 [shape = 'u8[16384]{0}', space=vmem, size = 0x4000, scoped, tag = 'input window, operand 1, single buffered']
    #allocation5 [shape = 's32[1]{0}', space=sflag, size = 0x4, scoped, tag = 'scoped memory for tpu_custom_call.1']
    %7 = vsyncpa [#allocation5], 0
    // Predicated region
    $region2: #{tpu_custom_call.1} parent=1 // pred_check
      _
    $region3: #{tpu_custom_call.1} parent=1 // pred_check_branch
      %9 = sbr.rel (0) target = $region5
    $region4: #{tpu_custom_call.1} parent=1 // pred_region
      _
    $region5: #{tpu_custom_call.1} parent=1 // pred_fallthru
      _
    // Predicated region
    $region6: #{tpu_custom_call.1} parent=1 // pred_check
      _
    $region7: #{tpu_custom_call.1} parent=1 // pred_check_branch
      %11 = sbr.rel (0) target = $region9
    $region8: #{tpu_custom_call.1} parent=1 // pred_region
      %s13 = ssub.s32 512, 512
      %14 = vsyncadd [#allocation5], %s13
      %s15 = sshll.u32 [#allocation4], 4
      %s16 = int_to_ptr.vmem [resolvable:$true] %s15
      %21 = dma.hbm_to_vmem [thread:$0]  %s1, 512, %s16, [#allocation5], 128, 128, 8
    $region9: #{tpu_custom_call.1} parent=1 // pred_fallthru
      _
    // Predicated region
    $region10: #{tpu_custom_call.1} parent=1 // pred_check
      _
    $region11: #{tpu_custom_call.1} parent=1 // pred_check_branch
      %23 = sbr.rel (0) target = $region13
    $region12: #{tpu_custom_call.1} parent=1 // pred_region
      %24 = dma.done [#allocation5], 512
    $region13: #{tpu_custom_call.1} parent=1 // pred_fallthru
      _
    %v25 = vld [vmem:[%s0] sm:$0xff]
    %v26 = vld [vmem:[%s0 + $0x8] sm:$0xff]
    %vm27 = vcmask 64512
    %28 = vst.msk [vmem:[%s2] sm:$0xff] %vm27, %v25
    %29 = vst.msk [vmem:[%s2 + $0x8] sm:$0xff] %vm27, %v26
    %30 = vst.msk [vmem:[#allocation2] sm:$0xff] %vm27, %v25
    %31 = vst.msk [vmem:[#allocation2 + $0x8] sm:$0xff] %vm27, %v26
    %v32 = vld [vmem:[#allocation4] sm:$0xff]
    %v33 = vld [vmem:[#allocation4 + $0x8] sm:$0xff]
    %v34 = vld [vmem:[#allocation2] sm:$0xff]
    %v35 = vld [vmem:[#allocation2 + $0x8] sm:$0xff]
    %vm36 = vcmask 130048
    %v38 = vsel %vm36, %v32, 0
    %v41 = vsel %vm36, %v33, 0
    %43 = vmatprep.subr.mxu0 0.0
    %44 = vmatpush1.msra.mxu0 %v34
    %45 = vmatprep.subr.mxu0 0.0
    %46 = vmatpush1.msra.mxu0 %v35
    %47 = vmatprep.subr.mxu0 0.0
    %48 = vmatpush1.msra.mxu0 0.0
    %49 = vmatprep.subr.mxu0 0.0
    %50 = vmatpush1.msra.mxu0 0.0
    %51 = vmatprep.subr.mxu0 0.0
    %52 = vmatpush1.msra.mxu0 0.0
    %53 = vmatprep.subr.mxu0 0.0
    %54 = vmatpush1.msra.mxu0 0.0
    %55 = vmatprep.subr.mxu0 0.0
    %56 = vmatpush1.msra.mxu0 0.0
    %57 = vmatprep.subr.mxu0 0.0
    %58 = vmatpush1.msra.mxu0 0.0
    %59 = vmatprep.subr.mxu0 0.0
    %60 = vmatpush1.msra.mxu0 0.0
    %61 = vmatprep.subr.mxu0 0.0
    %62 = vmatpush1.msra.mxu0 0.0
    %63 = vmatprep.subr.mxu0 0.0
    %64 = vmatpush1.msra.mxu0 0.0
    %65 = vmatprep.subr.mxu0 0.0
    %66 = vmatpush1.msra.mxu0 0.0
    %67 = vmatprep.subr.mxu0 0.0
    %68 = vmatpush1.msra.mxu0 0.0
    %69 = vmatprep.subr.mxu0 0.0
    %70 = vmatpush1.msra.mxu0 0.0
    %71 = vmatprep.subr.mxu0 0.0
    %72 = vmatpush1.msra.mxu0 0.0
    %73 = vmatprep.subr.mxu0 0.0
    %74 = vmatpush1.msra.mxu0 0.0
    %75 = vmatprep.subr.mxu0 0.0
    %76 = vmatpush1.msra.mxu0 0.0
    %77 = vmatprep.subr.mxu0 0.0
    %78 = vmatpush1.msra.mxu0 0.0
    %79 = vmatprep.subr.mxu0 0.0
    %80 = vmatpush1.msra.mxu0 0.0
    %81 = vmatprep.subr.mxu0 0.0
    %82 = vmatpush1.msra.mxu0 0.0
    %83 = vmatprep.subr.mxu0 0.0
    %84 = vmatpush1.msra.mxu0 0.0
    %85 = vmatprep.subr.mxu0 0.0
    %86 = vmatpush1.msra.mxu0 0.0
    %87 = vmatprep.subr.mxu0 0.0
    %88 = vmatpush1.msra.mxu0 0.0
    %89 = vmatprep.subr.mxu0 0.0
    %90 = vmatpush1.msra.mxu0 0.0
    %91 = vmatprep.subr.mxu0 0.0
    %92 = vmatpush1.msra.mxu0 0.0
    %93 = vmatprep.subr.mxu0 0.0
    %94 = vmatpush1.msra.mxu0 0.0
    %95 = vmatprep.subr.mxu0 0.0
    %96 = vmatpush1.msra.mxu0 0.0
    %97 = vmatprep.subr.mxu0 0.0
    %98 = vmatpush1.msra.mxu0 0.0
    %99 = vmatprep.subr.mxu0 0.0
    %100 = vmatpush1.msra.mxu0 0.0
    %101 = vmatprep.subr.mxu0 0.0
    %102 = vmatpush1.msra.mxu0 0.0
    %103 = vmatprep.subr.mxu0 0.0
    %104 = vmatpush1.msra.mxu0 0.0
    %105 = vmatprep.subr.mxu0 0.0
    %106 = vmatpush1.msra.mxu0 0.0
    %107 = vmatprep.mubr.f32.mxu0 0.0
    %108 = vmatmul.mubr.f32.gmra.mrb[0].mxu0 %v38
    %v109 = vpop.f32.mrb[0].mxu0
    %v110 = vadd.f32 0.0, %v109
    %v111 = vpop.f32.mrb[0].mxu0
    %112 = vmatprep.mubr.f32.mxu0 0.0
    %113 = vmatmul.mubr.f32.gmra.mrb[0].mxu0 %v41
    %v114 = vpop.f32.mrb[0].mxu0
    %v115 = vadd.f32 0.0, %v114
    %v116 = vpop.f32.mrb[0].mxu0
    %117 = vdwg.mxu0
    %118 = vst.msk [vmem:[#allocation3] sm:$0xff] %vm27, %v110
    %119 = vst.msk [vmem:[#allocation3 + $0x8] sm:$0xff] %vm27, %v115
    %s120 = scalar_lea.vmem %s2, 16
    %121 = vst.msk [vmem:[%s120] sm:$0xff] %vm27, %v110
    %122 = vst.msk [vmem:[%s120 + $0x8] sm:$0xff] %vm27, %v115
    %v123 = vld [vmem:[#allocation3] sm:$0xff]
    %v124 = vld [vmem:[#allocation3 + $0x8] sm:$0xff]
    %125 = vmatprep.subr.mxu0 0.0
    %126 = vmatpush1.msra.mxu0 %v123
    %127 = vmatprep.subr.mxu0 0.0
    %128 = vmatpush1.msra.mxu0 %v124
    %129 = vmatprep.subr.mxu0 0.0
    %130 = vmatpush1.msra.mxu0 0.0
    %131 = vmatprep.subr.mxu0 0.0
    %132 = vmatpush1.msra.mxu0 0.0
    %133 = vmatprep.subr.mxu0 0.0
    %134 = vmatpush1.msra.mxu0 0.0
    %135 = vmatprep.subr.mxu0 0.0
    %136 = vmatpush1.msra.mxu0 0.0
    %137 = vmatprep.subr.mxu0 0.0
    %138 = vmatpush1.msra.mxu0 0.0
    %139 = vmatprep.subr.mxu0 0.0
    %140 = vmatpush1.msra.mxu0 0.0
    %141 = vmatprep.subr.mxu0 0.0
    %142 = vmatpush1.msra.mxu0 0.0
    %143 = vmatprep.subr.mxu0 0.0
    %144 = vmatpush1.msra.mxu0 0.0
    %145 = vmatprep.subr.mxu0 0.0
    %146 = vmatpush1.msra.mxu0 0.0
    %147 = vmatprep.subr.mxu0 0.0
    %148 = vmatpush1.msra.mxu0 0.0
    %149 = vmatprep.subr.mxu0 0.0
    %150 = vmatpush1.msra.mxu0 0.0
    %151 = vmatprep.subr.mxu0 0.0
    %152 = vmatpush1.msra.mxu0 0.0
    %153 = vmatprep.subr.mxu0 0.0
    %154 = vmatpush1.msra.mxu0 0.0
    %155 = vmatprep.subr.mxu0 0.0
    %156 = vmatpush1.msra.mxu0 0.0
    %157 = vmatprep.subr.mxu0 0.0
    %158 = vmatpush1.msra.mxu0 0.0
    %159 = vmatprep.subr.mxu0 0.0
    %160 = vmatpush1.msra.mxu0 0.0
    %161 = vmatprep.subr.mxu0 0.0
    %162 = vmatpush1.msra.mxu0 0.0
    %163 = vmatprep.subr.mxu0 0.0
    %164 = vmatpush1.msra.mxu0 0.0
    %165 = vmatprep.subr.mxu0 0.0
    %166 = vmatpush1.msra.mxu0 0.0
    %167 = vmatprep.subr.mxu0 0.0
    %168 = vmatpush1.msra.mxu0 0.0
    %169 = vmatprep.subr.mxu0 0.0
    %170 = vmatpush1.msra.mxu0 0.0
    %171 = vmatprep.subr.mxu0 0.0
    %172 = vmatpush1.msra.mxu0 0.0
    %173 = vmatprep.subr.mxu0 0.0
    %174 = vmatpush1.msra.mxu0 0.0
    %175 = vmatprep.subr.mxu0 0.0
    %176 = vmatpush1.msra.mxu0 0.0
    %177 = vmatprep.subr.mxu0 0.0
    %178 = vmatpush1.msra.mxu0 0.0
    %179 = vmatprep.subr.mxu0 0.0
    %180 = vmatpush1.msra.mxu0 0.0
    %181 = vmatprep.subr.mxu0 0.0
    %182 = vmatpush1.msra.mxu0 0.0
    %183 = vmatprep.subr.mxu0 0.0
    %184 = vmatpush1.msra.mxu0 0.0
    %185 = vmatprep.subr.mxu0 0.0
    %186 = vmatpush1.msra.mxu0 0.0
    %187 = vmatprep.subr.mxu0 0.0
    %188 = vmatpush1.msra.mxu0 0.0
    %189 = vmatprep.mubr.f32.mxu0 0.0
    %190 = vmatmul.mubr.f32.gmra.mrb[0].mxu0 %v38
    %v191 = vpop.f32.mrb[0].mxu0
    %v192 = vadd.f32 0.0, %v191
    %v193 = vpop.f32.mrb[0].mxu0
    %194 = vmatprep.mubr.f32.mxu0 0.0
    %195 = vmatmul.mubr.f32.gmra.mrb[0].mxu0 %v41
    %v196 = vpop.f32.mrb[0].mxu0
    %v197 = vadd.f32 0.0, %v196
    %v198 = vpop.f32.mrb[0].mxu0
    %199 = vdwg.mxu0
    %v200 = vmul.f32 %v192, 2.0
    %v201 = vmul.f32 %v197, 2.0
    %v202 = vld [vmem:[#allocation2] sm:$0xff]
    %v203 = vld [vmem:[#allocation2 + $0x8] sm:$0xff]
    %v204 = vsub.f32 %v200, %v202
    %v205 = vsub.f32 %v201, %v203
    %s206 = scalar_lea.vmem %s2, 32
    %207 = vst.msk [vmem:[%s206] sm:$0xff] %vm27, %v204
    %208 = vst.msk [vmem:[%s206 + $0x8] sm:$0xff] %vm27, %v205
    %v209 = vld [vmem:[#allocation3] sm:$0xff]
    %v210 = vld [vmem:[#allocation3 + $0x8] sm:$0xff]
    %211 = vst.msk [vmem:[#allocation2] sm:$0xff] %vm27, %v209
    %212 = vst.msk [vmem:[#allocation2 + $0x8] sm:$0xff] %vm27, %v210
    %213 = vst.msk [vmem:[#allocation3] sm:$0xff] %vm27, %v204
    %214 = vst.msk [vmem:[#allocation3 + $0x8] sm:$0xff] %vm27, %v205
    %s215 = scalar_lea.vmem [#allocation4], 16
    %v216 = vld [vmem:[%s215] sm:$0xff]
    %v217 = vld [vmem:[%s215 + $0x8] sm:$0xff]
    %v218 = vld [vmem:[#allocation2] sm:$0xff]
    %v219 = vld [vmem:[#allocation2 + $0x8] sm:$0xff]
    %v221 = vsel %vm36, %v216, 0
    %v224 = vsel %vm36, %v217, 0
    %226 = vmatprep.subr.mxu0 0.0
    %227 = vmatpush1.msra.mxu0 %v218
    %228 = vmatprep.subr.mxu0 0.0
    %229 = vmatpush1.msra.mxu0 %v219
    %230 = vmatprep.subr.mxu0 0.0
    %231 = vmatpush1.msra.mxu0 0.0
    %232 = vmatprep.subr.mxu0 0.0
    %233 = vmatpush1.msra.mxu0 0.0
    %234 = vmatprep.subr.mxu0 0.0
    %235 = vmatpush1.msra.mxu0 0.0
    %236 = vmatprep.subr.mxu0 0.0
    %237 = vmatpush1.msra.mxu0 0.0
    %238 = vmatprep.subr.mxu0 0.0
    %239 = vmatpush1.msra.mxu0 0.0
    %240 = vmatprep.subr.mxu0 0.0
    %241 = vmatpush1.msra.mxu0 0.0
    %242 = vmatprep.subr.mxu0 0.0
    %243 = vmatpush1.msra.mxu0 0.0
    %244 = vmatprep.subr.mxu0 0.0
    %245 = vmatpush1.msra.mxu0 0.0
    %246 = vmatprep.subr.mxu0 0.0
    %247 = vmatpush1.msra.mxu0 0.0
    %248 = vmatprep.subr.mxu0 0.0
    %249 = vmatpush1.msra.mxu0 0.0
    %250 = vmatprep.subr.mxu0 0.0
    %251 = vmatpush1.msra.mxu0 0.0
    %252 = vmatprep.subr.mxu0 0.0
    %253 = vmatpush1.msra.mxu0 0.0
    %254 = vmatprep.subr.mxu0 0.0
    %255 = vmatpush1.msra.mxu0 0.0
    %256 = vmatprep.subr.mxu0 0.0
    %257 = vmatpush1.msra.mxu0 0.0
    %258 = vmatprep.subr.mxu0 0.0
    %259 = vmatpush1.msra.mxu0 0.0
    %260 = vmatprep.subr.mxu0 0.0
    %261 = vmatpush1.msra.mxu0 0.0
    %262 = vmatprep.subr.mxu0 0.0
    %263 = vmatpush1.msra.mxu0 0.0
    %264 = vmatprep.subr.mxu0 0.0
    %265 = vmatpush1.msra.mxu0 0.0
    %266 = vmatprep.subr.mxu0 0.0
    %267 = vmatpush1.msra.mxu0 0.0
    %268 = vmatprep.subr.mxu0 0.0
    %269 = vmatpush1.msra.mxu0 0.0
    %270 = vmatprep.subr.mxu0 0.0
    %271 = vmatpush1.msra.mxu0 0.0
    %272 = vmatprep.subr.mxu0 0.0
    %273 = vmatpush1.msra.mxu0 0.0
    %274 = vmatprep.subr.mxu0 0.0
    %275 = vmatpush1.msra.mxu0 0.0
    %276 = vmatprep.subr.mxu0 0.0
    %277 = vmatpush1.msra.mxu0 0.0
    %278 = vmatprep.subr.mxu0 0.0
    %279 = vmatpush1.msra.mxu0 0.0
    %280 = vmatprep.subr.mxu0 0.0
    %281 = vmatpush1.msra.mxu0 0.0
    %282 = vmatprep.subr.mxu0 0.0
    %283 = vmatpush1.msra.mxu0 0.0
    %284 = vmatprep.subr.mxu0 0.0
    %285 = vmatpush1.msra.mxu0 0.0
    %286 = vmatprep.subr.mxu0 0.0
    %287 = vmatpush1.msra.mxu0 0.0
    %288 = vmatprep.subr.mxu0 0.0
    %289 = vmatpush1.msra.mxu0 0.0
    %290 = vmatprep.mubr.f32.mxu0 0.0
    %291 = vmatmul.mubr.f32.gmra.mrb[0].mxu0 %v221
    %v292 = vpop.f32.mrb[0].mxu0
    %v293 = vadd.f32 0.0, %v292
    %v294 = vpop.f32.mrb[0].mxu0
    %295 = vmatprep.mubr.f32.mxu0 0.0
    %296 = vmatmul.mubr.f32.gmra.mrb[0].mxu0 %v224
    %v297 = vpop.f32.mrb[0].mxu0
    %v298 = vadd.f32 0.0, %v297
    %v299 = vpop.f32.mrb[0].mxu0
    %300 = vdwg.mxu0
    %301 = vst.msk [vmem:[#allocation3] sm:$0xff] %vm27, %v293
    %302 = vst.msk [vmem:[#allocation3 + $0x8] sm:$0xff] %vm27, %v298
    %s303 = scalar_lea.vmem %s2, 48
    %304 = vst.msk [vmem:[%s303] sm:$0xff] %vm27, %v293
    %305 = vst.msk [vmem:[%s303 + $0x8] sm:$0xff] %vm27, %v298
    %v306 = vld [vmem:[#allocation3] sm:$0xff]
    %v307 = vld [vmem:[#allocation3 + $0x8] sm:$0xff]
    %308 = vmatprep.subr.mxu0 0.0
    %309 = vmatpush1.msra.mxu0 %v306
    %310 = vmatprep.subr.mxu0 0.0
    %311 = vmatpush1.msra.mxu0 %v307
    %312 = vmatprep.subr.mxu0 0.0
    %313 = vmatpush1.msra.mxu0 0.0
    %314 = vmatprep.subr.mxu0 0.0
    %315 = vmatpush1.msra.mxu0 0.0
    %316 = vmatprep.subr.mxu0 0.0
    %317 = vmatpush1.msra.mxu0 0.0
    %318 = vmatprep.subr.mxu0 0.0
    %319 = vmatpush1.msra.mxu0 0.0
    %320 = vmatprep.subr.mxu0 0.0
    %321 = vmatpush1.msra.mxu0 0.0
    %322 = vmatprep.subr.mxu0 0.0
    %323 = vmatpush1.msra.mxu0 0.0
    %324 = vmatprep.subr.mxu0 0.0
    %325 = vmatpush1.msra.mxu0 0.0
    %326 = vmatprep.subr.mxu0 0.0
    %327 = vmatpush1.msra.mxu0 0.0
    %328 = vmatprep.subr.mxu0 0.0
    %329 = vmatpush1.msra.mxu0 0.0
    %330 = vmatprep.subr.mxu0 0.0
    %331 = vmatpush1.msra.mxu0 0.0
    %332 = vmatprep.subr.mxu0 0.0
    %333 = vmatpush1.msra.mxu0 0.0
    %334 = vmatprep.subr.mxu0 0.0
    %335 = vmatpush1.msra.mxu0 0.0
    %336 = vmatprep.subr.mxu0 0.0
    %337 = vmatpush1.msra.mxu0 0.0
    %338 = vmatprep.subr.mxu0 0.0
    %339 = vmatpush1.msra.mxu0 0.0
    %340 = vmatprep.subr.mxu0 0.0
    %341 = vmatpush1.msra.mxu0 0.0
    %342 = vmatprep.subr.mxu0 0.0
    %343 = vmatpush1.msra.mxu0 0.0
    %344 = vmatprep.subr.mxu0 0.0
    %345 = vmatpush1.msra.mxu0 0.0
    %346 = vmatprep.subr.mxu0 0.0
    %347 = vmatpush1.msra.mxu0 0.0
    %348 = vmatprep.subr.mxu0 0.0
    %349 = vmatpush1.msra.mxu0 0.0
    %350 = vmatprep.subr.mxu0 0.0
    %351 = vmatpush1.msra.mxu0 0.0
    %352 = vmatprep.subr.mxu0 0.0
    %353 = vmatpush1.msra.mxu0 0.0
    %354 = vmatprep.subr.mxu0 0.0
    %355 = vmatpush1.msra.mxu0 0.0
    %356 = vmatprep.subr.mxu0 0.0
    %357 = vmatpush1.msra.mxu0 0.0
    %358 = vmatprep.subr.mxu0 0.0
    %359 = vmatpush1.msra.mxu0 0.0
    %360 = vmatprep.subr.mxu0 0.0
    %361 = vmatpush1.msra.mxu0 0.0
    %362 = vmatprep.subr.mxu0 0.0
    %363 = vmatpush1.msra.mxu0 0.0
    %364 = vmatprep.subr.mxu0 0.0
    %365 = vmatpush1.msra.mxu0 0.0
    %366 = vmatprep.subr.mxu0 0.0
    %367 = vmatpush1.msra.mxu0 0.0
    %368 = vmatprep.subr.mxu0 0.0
    %369 = vmatpush1.msra.mxu0 0.0
    %370 = vmatprep.subr.mxu0 0.0
    %371 = vmatpush1.msra.mxu0 0.0
    %372 = vmatprep.mubr.f32.mxu0 0.0
    %373 = vmatmul.mubr.f32.gmra.mrb[0].mxu0 %v221
    %v374 = vpop.f32.mrb[0].mxu0
    %v375 = vadd.f32 0.0, %v374
    %v376 = vpop.f32.mrb[0].mxu0
    %377 = vmatprep.mubr.f32.mxu0 0.0
    %378 = vmatmul.mubr.f32.gmra.mrb[0].mxu0 %v224
    %v379 = vpop.f32.mrb[0].mxu0
    %v380 = vadd.f32 0.0, %v379
    %v381 = vpop.f32.mrb[0].mxu0
    %382 = vdwg.mxu0
    %v383 = vmul.f32 %v375, 2.0
    %v384 = vmul.f32 %v380, 2.0
    %v385 = vld [vmem:[#allocation2] sm:$0xff]
    %v386 = vld [vmem:[#allocation2 + $0x8] sm:$0xff]
    %v387 = vsub.f32 %v383, %v385
    %v388 = vsub.f32 %v384, %v386
    %s389 = scalar_lea.vmem %s2, 64
    %390 = vst.msk [vmem:[%s389] sm:$0xff] %vm27, %v387
    %391 = vst.msk [vmem:[%s389 + $0x8] sm:$0xff] %vm27, %v388
    %v392 = vld [vmem:[#allocation3] sm:$0xff]
    %v393 = vld [vmem:[#allocation3 + $0x8] sm:$0xff]
    %394 = vst.msk [vmem:[#allocation2] sm:$0xff] %vm27, %v392
    %395 = vst.msk [vmem:[#allocation2 + $0x8] sm:$0xff] %vm27, %v393
    %396 = vst.msk [vmem:[#allocation3] sm:$0xff] %vm27, %v387
    %397 = vst.msk [vmem:[#allocation3 + $0x8] sm:$0xff] %vm27, %v388
    // Predicated region
    $region14: #{tpu_custom_call.1} parent=1 // pred_check
      _
    $region15: #{tpu_custom_call.1} parent=1 // pred_check_branch
      %399 = sbr.rel (0) target = $region17
    $region16: #{tpu_custom_call.1} parent=1 // pred_region
      _
    $region17: #{tpu_custom_call.1} parent=1 // pred_fallthru
      _
    // Predicated region
    $region18: #{tpu_custom_call.1} parent=1 // pred_check
      _
    $region19: #{tpu_custom_call.1} parent=1 // pred_check_branch
      %401 = sbr.rel (0) target = $region21
    $region20: #{tpu_custom_call.1} parent=1 // pred_region
      _
    $region21: #{tpu_custom_call.1} parent=1 // pred_fallthru
      _
    %402 = vsyncpa [#allocation5], 1

</llo_original>
